<compile_context>
chip_gen: v7x
topology: tpu7x:2x2x1
jax: 0.10.0
libtpu: 0.0.40
codegen_flags: <defaults>
</compile_context>

<pallas_src>
import functools

import jax
import jax.numpy as jnp
from jax.experimental import pallas as pl
from jax.experimental.pallas import tpu as pltpu


# ----------------------------------------------------------------------------
# helpers
# ----------------------------------------------------------------------------
def _round_up(x, m):
    return ((x + m - 1) // m) * m


def _cdiv(a, b):
    return (a + b - 1) // b


# ----------------------------------------------------------------------------
# kernels
# ----------------------------------------------------------------------------
def _conv_down_kernel(x_ref, w_ref, b_ref, o_ref, *, wp):
    """One (batch, H-tile) grid step.

    x_ref: ((TH+2)*Wp, K)  flattened phase rows (incl. halo/pad rows), K = 4*Cin
    w_ref: (4, K, Cp)      shift-stacked weights, Cp = lane-padded Cout
    b_ref: (1, Cp)         f32 bias
    o_ref: (TH*Wp, Cp)     flattened output tile (lane-dense stores)
    """
    M, _ = o_ref.shape

    # Four shifted views of the flattened phase tile.  Row offsets:
    #   +0   -> (dh=0, dw=0)     +1    -> (dh=0, dw=1)
    #   +Wp  -> (dh=1, dw=0)     +Wp+1 -> (dh=1, dw=1)
    # (the flattened "+1" only crosses a phase-row boundary inside the padded
    #  garbage output columns, which the wrapper slices off).
    x00 = x_ref[0:M, :]
    x01 = x_ref[1:M + 1, :]
    x10 = x_ref[wp:wp + M, :]
    x11 = x_ref[wp + 1:wp + M + 1, :]

    # Value-carried accumulator: first dot initializes, the rest accumulate.
    acc = jnp.dot(x00, w_ref[0], preferred_element_type=jnp.float32)
    acc = acc + jnp.dot(x01, w_ref[1], preferred_element_type=jnp.float32)
    acc = acc + jnp.dot(x10, w_ref[2], preferred_element_type=jnp.float32)
    acc = acc + jnp.dot(x11, w_ref[3], preferred_element_type=jnp.float32)

    # Bias fused into the epilogue cast/store.
    o_ref[...] = (acc + b_ref[...]).astype(o_ref.dtype)


def _avg_pool_kernel(x_ref, p_ref, o_ref):
    """x_ref: (TR, 2W) row-pair tile; p_ref: (W, Wout) 0.25*pair-select matrix."""
    W = p_ref.shape[0]
    s = (x_ref[:, 0:W].astype(jnp.float32)
         + x_ref[:, W:2 * W].astype(jnp.float32))
    o_ref[...] = jnp.dot(s, p_ref[...],
                         preferred_element_type=jnp.float32).astype(o_ref.dtype)


# ----------------------------------------------------------------------------
# wrappers
# ----------------------------------------------------------------------------
def downsample_with_conv(x_nchw, weight_oihw, bias,
                         *, vmem_budget_bytes=20 * 1024 * 1024):
    """Conv path. x: (B, C, H, W); weight: (Cout, Cin, 3, 3); bias: (Cout,)."""
    B, C, H, W = x_nchw.shape
    Cout = weight_oihw.shape[0]
    assert weight_oihw.shape == (Cout, C, 3, 3)
    assert H % 2 == 0 and W % 2 == 0, "even spatial dims required"

    Hout, Wout = H // 2, W // 2
    K = 4 * C                              # 4 stride-2 phases stacked on lanes
    Cp = _round_up(Cout, 128)              # lane-dense output stores
    Wp = _round_up(Wout + 1, 8)            # sublane-aligned phase-row width
    dtype = x_nchw.dtype
    isz = jnp.dtype(dtype).itemsize
    wsz = jnp.dtype(weight_oihw.dtype).itemsize

    # --- H tile size: conservative VMEM accounting incl. in-kernel temps -----
    per_row = (2 * Wp * K * isz            # input double buffer
               + 2 * Wp * Cp * isz         # output double buffer
               + 4 * Wp * K * 4            # four shifted operand loads
               + 2 * Wp * Cp * 4)          # f32 accumulator + dot result
    fixed = (2 * 4 * K * Cp * wsz          # weights (double-buffered worst case)
             + 2 * Cp * 4                  # bias
             + 2 * 2 * Wp * K * isz)       # two extra halo/pad rows per tile
    cap = max(1, (vmem_budget_bytes - fixed) // per_row)
    mc_cap = Hout if B >= 2 else max(1, _cdiv(Hout, 2))   # feed both v7x cores
    TH = max(1, min(Hout, cap, mc_cap))
    n_h = _cdiv(Hout, TH)
    TH = _cdiv(Hout, n_h)                  # rebalance (no divisor collapse)
    Hpad = n_h * TH

    # --- activations: pad, space-to-depth the 4 stride-2 phases onto lanes ---
    xp = jnp.pad(x_nchw, ((0, 0), (0, 0), (0, 2), (0, 2)))       # (B,C,H+2,W+2)
    xp = xp.reshape(B, C, Hout + 1, 2, Wout + 1, 2)
    xph = jnp.transpose(xp, (0, 2, 4, 3, 5, 1)).reshape(B, Hout + 1, Wout + 1, K)
    xph = jnp.pad(xph, ((0, 0),
                        (0, Hpad + 2 - (Hout + 1)),
                        (0, Wp - (Wout + 1)),
                        (0, 0)))                                  # (B,Hpad+2,Wp,K)

    R = (TH + 2) * Wp                      # flattened rows per tile (incl. halo)
    M = TH * Wp                            # flattened output rows per tile
    if n_h == 1:
        x_tiled = xph.reshape(B, 1, R, K)                        # pure bitcast
    else:
        main = xph[:, :Hpad].reshape(B, n_h, TH, Wp, K)
        row_idx = jnp.arange(n_h)[:, None] * TH + TH + jnp.arange(2)[None, :]
        halo = jnp.take(xph, row_idx, axis=1)                    # (B,n_h,2,Wp,K)
        x_tiled = jnp.concatenate([main, halo], axis=2).reshape(B, n_h, R, K)

    # --- weights: zero-extend 3x3 -> 4x4 taps, regroup into (dh,dw) shifts ---
    w = jnp.transpose(weight_oihw, (2, 3, 1, 0))                 # (3,3,Cin,Cout)
    w = jnp.pad(w, ((0, 1), (0, 1), (0, 0), (0, 0)))             # (4,4,Cin,Cout)
    w = w.reshape(2, 2, 2, 2, C, Cout).transpose(0, 2, 1, 3, 4, 5)
    w_shift = w.reshape(4, K, Cout)
    b = bias.reshape(1, Cout).astype(jnp.float32)
    if Cp != Cout:
        w_shift = jnp.pad(w_shift, ((0, 0), (0, 0), (0, Cp - Cout)))
        b = jnp.pad(b, ((0, 0), (0, Cp - Cout)))

    flops = 2 * B * n_h * 4 * M * K * Cp
    bytes_accessed = int(B * n_h * R * K * isz + 4 * K * Cp * wsz
                         + B * n_h * M * Cp * isz)

    out = pl.pallas_call(
        functools.partial(_conv_down_kernel, wp=Wp),
        out_shape=jax.ShapeDtypeStruct((B, n_h, M, Cp), dtype),
        grid_spec=pltpu.PrefetchScalarGridSpec(
            num_scalar_prefetch=0,
            grid=(B, n_h),
            in_specs=[
                pl.BlockSpec((None, None, R, K), lambda bi, hi: (bi, hi, 0, 0)),
                pl.BlockSpec((4, K, Cp), lambda bi, hi: (0, 0, 0)),
                pl.BlockSpec((1, Cp), lambda bi, hi: (0, 0)),
            ],
            out_specs=pl.BlockSpec((None, None, M, Cp),
                                   lambda bi, hi: (bi, hi, 0, 0)),
        ),
        compiler_params=pltpu.CompilerParams(
            dimension_semantics=("parallel", "parallel"),
            vmem_limit_bytes=48 * 1024 * 1024),
        cost_estimate=pl.CostEstimate(flops=int(flops), transcendentals=0,
                                      bytes_accessed=bytes_accessed),
    )(x_tiled, w_shift, b)

    # bitcast reshape + a single slice/transpose pass back to the NCHW contract
    out = out.reshape(B, Hpad, Wp, Cp)[:, :Hout, :Wout, :Cout]
    return jnp.transpose(out, (0, 3, 1, 2))


def downsample_avg_pool(x_nchw, *, vmem_budget_bytes=20 * 1024 * 1024):
    """avg_pool2d(kernel=2, stride=2) path. x: (B, C, H, W)."""
    B, C, H, W = x_nchw.shape
    assert H % 2 == 0 and W % 2 == 0, "even spatial dims required"
    Hout, Wout = H // 2, W // 2
    dtype = x_nchw.dtype
    isz = jnp.dtype(dtype).itemsize

    Rrows = B * C * Hout
    # pure bitcast: each row holds the two input rows feeding one pooled row
    x2d = x_nchw.reshape(Rrows, 2 * W)

    # 0.25 * pair-select matrix: out[:, j] = 0.25*(s[:, 2j] + s[:, 2j+1])
    pool_mat = (0.25 * ((jnp.arange(W) // 2)[:, None]
                        == jnp.arange(Wout)[None, :])).astype(jnp.float32)

    per_row = (2 * 2 * W * isz             # input double buffer
               + 2 * Wout * isz            # output double buffer
               + 2 * W * 4 + W * 4         # loads + f32 row sums
               + 2 * Wout * 4)             # dot result
    fixed = 2 * W * Wout * 4               # pooling matrix (worst case)
    cap = max(1, (vmem_budget_bytes - fixed) // per_row)
    mc_cap = max(1, _cdiv(Rrows, 2))       # >= 2 grid steps for v7x megacore
    TR = max(1, min(Rrows, cap, mc_cap))
    if TR < Rrows:
        TR = min(max(8, (TR // 8) * 8), Rrows)   # keep sublane dim 8-aligned
    n_r = _cdiv(Rrows, TR)

    out = pl.pallas_call(
        _avg_pool_kernel,
        out_shape=jax.ShapeDtypeStruct((Rrows, Wout), dtype),
        grid_spec=pltpu.PrefetchScalarGridSpec(
            num_scalar_prefetch=0,
            grid=(n_r,),
            in_specs=[
                pl.BlockSpec((TR, 2 * W), lambda i: (i, 0)),
                pl.BlockSpec((W, Wout), lambda i: (0, 0)),
            ],
            out_specs=pl.BlockSpec((TR, Wout), lambda i: (i, 0)),
        ),
        compiler_params=pltpu.CompilerParams(
            dimension_semantics=("parallel",),
            vmem_limit_bytes=32 * 1024 * 1024),
        cost_estimate=pl.CostEstimate(
            flops=int(2 * Rrows * W * Wout + Rrows * W), transcendentals=0,
            bytes_accessed=int(Rrows * 2 * W * isz + Rrows * Wout * isz)),
    )(x2d, pool_mat)

    return out.reshape(B, C, Hout, Wout)       # already NCHW, pure bitcast


# ----------------------------------------------------------------------------
# pure-JAX references
# ----------------------------------------------------------------------------
def _ref_conv(x_nchw, w_oihw, bias):
    xp = jnp.pad(x_nchw, ((0, 0), (0, 0), (0, 1), (0, 1)))
    out = jax.lax.conv_general_dilated(
        xp, w_oihw, window_strides=(2, 2), padding="VALID",
        dimension_numbers=("NCHW", "OIHW", "NCHW"))
    return out + bias.reshape(1, -1, 1, 1)


def _ref_avg_pool(x_nchw):
    B, C, H, W = x_nchw.shape
    return x_nchw.reshape(B, C, H // 2, 2, W // 2, 2).mean(axis=(3, 5))


# ----------------------------------------------------------------------------
if __name__ == "__main__":
    key = jax.random.PRNGKey(0)
    kx, kw, kb = jax.random.split(key, 3)

    B, C, H, W = 2, 4, 16, 16
    x = jax.random.normal(kx, (B, C, H, W), dtype=jnp.float32)

    # Deterministic synthetic Conv2d(C, C, 3, stride=2) parameters (OIHW).
    fan_in = C * 3 * 3
    bound = 1.0 / (fan_in ** 0.5)
    weight = jax.random.uniform(kw, (C, C, 3, 3), jnp.float32, -bound, bound)
    bias = jax.random.uniform(kb, (C,), jnp.float32, -bound, bound)

    # with_conv = True path
    y_conv = downsample_with_conv(x, weight, bias)
    jax.block_until_ready(y_conv)
    y_conv_ref = _ref_conv(x, weight, bias)
    assert y_conv.shape == (B, C, H // 2, W // 2), y_conv.shape
    assert jnp.allclose(y_conv, y_conv_ref, atol=1e-4, rtol=1e-4)

    # same path with a tiny VMEM budget to exercise the multi-tile (halo) grid
    y_conv_t = downsample_with_conv(x, weight, bias, vmem_budget_bytes=100_000)
    jax.block_until_ready(y_conv_t)
    assert jnp.allclose(y_conv_t, y_conv_ref, atol=1e-4, rtol=1e-4)

    # with_conv = False path
    y_pool = downsample_avg_pool(x)
    jax.block_until_ready(y_pool)
    y_pool_ref = _ref_avg_pool(x)
    assert y_pool.shape == (B, C, H // 2, W // 2), y_pool.shape
    assert jnp.allclose(y_pool, y_pool_ref, atol=1e-5, rtol=1e-5)

    y_pool_t = downsample_avg_pool(x, vmem_budget_bytes=4_000)
    jax.block_until_ready(y_pool_t)
    assert jnp.allclose(y_pool_t, y_pool_ref, atol=1e-5, rtol=1e-5)

    print("KERNEL_OK")
</pallas_src>

<mosaic_0001>
module attributes {stable_mosaic.version = 11 : i64} {
  func.func @_conv_down_kernel(%arg0: i32, %arg1: i32, %arg2: memref<1x1x160x16xf32, #tpu.memory_space<vmem>>, %arg3: memref<4x16x128xf32, #tpu.memory_space<vmem>>, %arg4: memref<1x128xf32, #tpu.memory_space<vmem>>, %arg5: memref<1x1x128x128xf32, #tpu.memory_space<vmem>>) attributes {dimension_semantics = [#tpu.dimension_semantics<parallel>, #tpu.dimension_semantics<parallel>], iteration_bounds = array<i64: 2, 1>, scalar_prefetch = 0 : i64, scratch_operands = 0 : i64, tpu.core_type = #tpu.core_type<tc>, window_params = [{transform_indices = @transform_0, window_bounds = array<i64: 1, 1, 160, 16>}, {pipeline_mode = #tpu.pipeline_mode<synchronous>, transform_indices = @transform_1, window_bounds = array<i64: 4, 16, 128>}, {pipeline_mode = #tpu.pipeline_mode<synchronous>, transform_indices = @transform_2, window_bounds = array<i64: 1, 128>}, {transform_indices = @transform_3, window_bounds = array<i64: 1, 1, 128, 128>}]} {
    %c0 = arith.constant 0 : index
    %c0_0 = arith.constant 0 : index
    %c0_1 = arith.constant 0 : index
    %c0_2 = arith.constant 0 : index
    %0 = vector.load %arg2[%c0, %c0_0, %c0_1, %c0_2] : memref<1x1x160x16xf32, #tpu.memory_space<vmem>>, vector<1x1x128x16xf32>
    %1 = vector.shape_cast %0 : vector<1x1x128x16xf32> to vector<128x16xf32>
    %c0_3 = arith.constant 0 : index
    %c0_4 = arith.constant 0 : index
    %c1 = arith.constant 1 : index
    %c0_5 = arith.constant 0 : index
    %2 = vector.load %arg2[%c0_3, %c0_4, %c1, %c0_5] : memref<1x1x160x16xf32, #tpu.memory_space<vmem>>, vector<1x1x128x16xf32>
    %3 = vector.shape_cast %2 : vector<1x1x128x16xf32> to vector<128x16xf32>
    %c0_6 = arith.constant 0 : index
    %c0_7 = arith.constant 0 : index
    %c16 = arith.constant 16 : index
    %c0_8 = arith.constant 0 : index
    %4 = vector.load %arg2[%c0_6, %c0_7, %c16, %c0_8] : memref<1x1x160x16xf32, #tpu.memory_space<vmem>>, vector<1x1x128x16xf32>
    %5 = vector.shape_cast %4 : vector<1x1x128x16xf32> to vector<128x16xf32>
    %c0_9 = arith.constant 0 : index
    %c0_10 = arith.constant 0 : index
    %c17 = arith.constant 17 : index
    %c0_11 = arith.constant 0 : index
    %6 = vector.load %arg2[%c0_9, %c0_10, %c17, %c0_11] : memref<1x1x160x16xf32, #tpu.memory_space<vmem>>, vector<1x1x128x16xf32>
    %7 = vector.shape_cast %6 : vector<1x1x128x16xf32> to vector<128x16xf32>
    %c0_12 = arith.constant 0 : index
    %c0_13 = arith.constant 0 : index
    %c0_14 = arith.constant 0 : index
    %8 = vector.load %arg3[%c0_12, %c0_13, %c0_14] : memref<4x16x128xf32, #tpu.memory_space<vmem>>, vector<1x16x128xf32>
    %9 = vector.shape_cast %8 : vector<1x16x128xf32> to vector<16x128xf32>
    %cst = arith.constant dense<0.000000e+00> : vector<128x128xf32>
    %10 = tpu.matmul %1, %9, %cst {dimension_numbers = #tpu.dot_dimension_numbers<[1], [0], [0], [1], [0, 0, 1, 1], [], []>} : vector<128x16xf32>, vector<16x128xf32>, vector<128x128xf32> -> vector<128x128xf32>
    %c1_15 = arith.constant 1 : index
    %c0_16 = arith.constant 0 : index
    %c0_17 = arith.constant 0 : index
    %11 = vector.load %arg3[%c1_15, %c0_16, %c0_17] : memref<4x16x128xf32, #tpu.memory_space<vmem>>, vector<1x16x128xf32>
    %12 = vector.shape_cast %11 : vector<1x16x128xf32> to vector<16x128xf32>
    %cst_18 = arith.constant dense<0.000000e+00> : vector<128x128xf32>
    %13 = tpu.matmul %3, %12, %cst_18 {dimension_numbers = #tpu.dot_dimension_numbers<[1], [0], [0], [1], [0, 0, 1, 1], [], []>} : vector<128x16xf32>, vector<16x128xf32>, vector<128x128xf32> -> vector<128x128xf32>
    %14 = arith.addf %10, %13 : vector<128x128xf32>
    %c2 = arith.constant 2 : index
    %c0_19 = arith.constant 0 : index
    %c0_20 = arith.constant 0 : index
    %15 = vector.load %arg3[%c2, %c0_19, %c0_20] : memref<4x16x128xf32, #tpu.memory_space<vmem>>, vector<1x16x128xf32>
    %16 = vector.shape_cast %15 : vector<1x16x128xf32> to vector<16x128xf32>
    %cst_21 = arith.constant dense<0.000000e+00> : vector<128x128xf32>
    %17 = tpu.matmul %5, %16, %cst_21 {dimension_numbers = #tpu.dot_dimension_numbers<[1], [0], [0], [1], [0, 0, 1, 1], [], []>} : vector<128x16xf32>, vector<16x128xf32>, vector<128x128xf32> -> vector<128x128xf32>
    %18 = arith.addf %14, %17 : vector<128x128xf32>
    %c3 = arith.constant 3 : index
    %c0_22 = arith.constant 0 : index
    %c0_23 = arith.constant 0 : index
    %19 = vector.load %arg3[%c3, %c0_22, %c0_23] : memref<4x16x128xf32, #tpu.memory_space<vmem>>, vector<1x16x128xf32>
    %20 = vector.shape_cast %19 : vector<1x16x128xf32> to vector<16x128xf32>
    %cst_24 = arith.constant dense<0.000000e+00> : vector<128x128xf32>
    %21 = tpu.matmul %7, %20, %cst_24 {dimension_numbers = #tpu.dot_dimension_numbers<[1], [0], [0], [1], [0, 0, 1, 1], [], []>} : vector<128x16xf32>, vector<16x128xf32>, vector<128x128xf32> -> vector<128x128xf32>
    %22 = arith.addf %18, %21 : vector<128x128xf32>
    %c0_25 = arith.constant 0 : index
    %c0_26 = arith.constant 0 : index
    %23 = vector.load %arg4[%c0_25, %c0_26] : memref<1x128xf32, #tpu.memory_space<vmem>>, vector<1x128xf32>
    %24 = vector.broadcast %23 : vector<1x128xf32> to vector<128x128xf32>
    %25 = arith.addf %22, %24 : vector<128x128xf32>
    %c0_27 = arith.constant 0 : index
    %c0_28 = arith.constant 0 : index
    %c0_29 = arith.constant 0 : index
    %c0_30 = arith.constant 0 : index
    %26 = vector.load %arg5[%c0_27, %c0_28, %c0_29, %c0_30] : memref<1x1x128x128xf32, #tpu.memory_space<vmem>>, vector<1x1x128x128xf32>
    %27 = vector.shape_cast %26 : vector<1x1x128x128xf32> to vector<128x128xf32>
    %28 = vector.shape_cast %25 : vector<128x128xf32> to vector<1x1x128x128xf32>
    tpu.vector_store %arg5[%c0_27, %c0_28, %c0_29, %c0_30], %28 {strides = array<i32>} : memref<1x1x128x128xf32, #tpu.memory_space<vmem>>, vector<1x1x128x128xf32>,
    return
  }
  func.func @transform_0(%arg0: i32, %arg1: i32) -> (i32, i32, i32, i32) {
    %c0_i32 = arith.constant 0 : i32
    %c0_i32_0 = arith.constant 0 : i32
    %c0_i32_1 = arith.constant 0 : i32
    return %arg0, %arg1, %c0_i32, %c0_i32_0 : i32, i32, i32, i32
  }
  func.func @transform_1(%arg0: i32, %arg1: i32) -> (i32, i32, i32) {
    %c0_i32 = arith.constant 0 : i32
    %c0_i32_0 = arith.constant 0 : i32
    %c0_i32_1 = arith.constant 0 : i32
    %c0_i32_2 = arith.constant 0 : i32
    return %c0_i32, %c0_i32_0, %c0_i32_1 : i32, i32, i32
  }
  func.func @transform_2(%arg0: i32, %arg1: i32) -> (i32, i32) {
    %c0_i32 = arith.constant 0 : i32
    %c0_i32_0 = arith.constant 0 : i32
    %c0_i32_1 = arith.constant 0 : i32
    return %c0_i32, %c0_i32_0 : i32, i32
  }
  func.func @transform_3(%arg0: i32, %arg1: i32) -> (i32, i32, i32, i32) {
    %c0_i32 = arith.constant 0 : i32
    %c0_i32_0 = arith.constant 0 : i32
    %c0_i32_1 = arith.constant 0 : i32
    return %arg0, %arg1, %c0_i32, %c0_i32_0 : i32, i32, i32, i32
  }
}

</mosaic_0001>

<llo_original>
// kernel: tpu_custom_call.1
$region0: #{tpu_custom_call.1}
  #allocation0 [shape = 'u32[]', space=smem, size = 0x4, offset = 0x4, fixed_abs, tag = 'smem constant byte address 0x4 - core index']
  #allocation1 [shape = 'u32[144,128]{1,0:T(1,128)}', space=vmem, size = 0x12000, scoped, tag = 'internal scratch']
  %s0 = inlined_call_operand.vmem [shape: f32[2,1,160,16], index: 0, kind: input, shape index: {}]
  %s1 = inlined_call_operand.vmem [shape: f32[4,16,128], index: 1, kind: input, shape index: {}]
  %s2 = inlined_call_operand.vmem [shape: f32[1,128], index: 2, kind: input, shape index: {}]
  %s3 = inlined_call_operand.hbm [shape: f32[2,1,128,128], index: 3, kind: output, shape index: {}]
  %s4 = sld [smem:[#allocation0]]
  $region45: #{tpu_custom_call.1} parent=0
    _
  %s6 = ssub.s32 1, %s4
  %s7 = scalar_select 0, %s6, %s4
  $region1: #{tpu_custom_call.1} parent=0
    #allocation2 [shape = 'u8[131072]{0}', space=vmem, size = 0x20000, scoped, tag = 'output window, operand 0']
    #allocation3 [shape = 's32[2]{0}', space=sflag, size = 0x8, scoped, tag = 'scoped memory for tpu_custom_call.1']
    %8 = vsyncpa [#allocation3], 0
    %s9 = scalar_lea.sflag [#allocation3], 1
    %10 = vsyncpa %s9, 0
    loop: start=0, step=1, limit=4
    $region2: #{tpu_custom_call.1} parent=1 // loop_pre_header
      _
    $region3: #{tpu_custom_call.1} parent=1 // loop_header
      %s12 = sphi 0, %s16
      %p13 = scmp.ge.s32.totalorder %s12, 4
      %s19 = sphi 0, %s31
      %s20 = sphi 0, %s27
      %s21 = sphi 0, %s19
      %s22 = sphi 0, %s20
      %s23 = sphi 0, %s21
      %s24 = sphi 0, %s22
      %s36 = sphi 0, %s38
      %s39 = sphi 0, %s36
      %s40 = sphi 0, %s39
      %s56 = sphi 0, %s40
      %s60 = sphi 0, %s60
      %s62 = sphi 0, %s60
      %s63 = sphi 0, %s62
      %s77 = sphi 0, %s63
      %s81 = sphi 0, %s81
      %s83 = sphi 0, %s81
      %s84 = sphi 0, %s83
      %s98 = sphi 0, %s84
      %s106 = sphi 0, %s108
      %s109 = sphi 0, %s106
      %s110 = sphi 0, %s109
      %s126 = sphi 0, %s110
    $region4: #{tpu_custom_call.1} parent=1 // loop_header_branch
      %15 = sbr.rel (%p13) target = $region8
    $region5: #{tpu_custom_call.1} parent=1 // loop_body
      %s17 = ssub.s32 %s12, 1
      %s18 = ssub.s32 %s12, 2
      %s25 = sadd.s32 1, %s20
      %p26 = scmp.ge.s32.totalorder %s25, 1
      %s27 = scalar_select %p26, 0, %s25
      %s28 = sadd.s32 1, %s19
      %s29 = scalar_select %p26, %s28, %s19
      %p30 = scmp.ge.s32.totalorder %s29, 2
      %s31 = scalar_select %p30, 0, %s29
      %s32 = ssub.s32 %s19, %s31
      %s33 = ssub.s32 %s20, %s27
      %s34 = sor.u32 %s32, %s33
      %p35 = scmp.eq.s32.totalorder %s34, 0
      %s37 = sadd.s32 %s36, 1
      %s38 = scalar_select %p35, %s36, %s37
      %p41 = pneg %p35
      %p42 = scmp.eq.s32.totalorder %s12, 1
      %p43 = por %p41, %p42
      %p44 = scmp.ne.s32.totalorder %s36, %s39
      %p45 = scmp.eq.s32.totalorder %s12, 0
      %p46 = por %p44, %p45
      %p47 = scmp.ne.s32.totalorder %s36, %s39
      %p48 = scmp.eq.s32.totalorder %s17, 1
      %p49 = por %p47, %p48
      %p50 = scmp.ne.s32.totalorder %s39, %s40
      %p51 = scmp.eq.s32.totalorder %s17, 0
      %p52 = por %p50, %p51
      %p53 = scmp.ne.s32.totalorder %s39, %s40
      %p54 = scmp.eq.s32.totalorder %s18, 1
      %p55 = por %p53, %p54
      %p57 = scmp.ne.s32.totalorder %s40, %s56
      %p58 = scmp.eq.s32.totalorder %s18, 0
      %p59 = por %p57, %p58
      %s61 = sadd.s32 %s60, 1
      %p64 = scmp.eq.s32.totalorder %s12, 1
      %p65 = scmp.ne.s32.totalorder %s60, %s62
      %p66 = scmp.eq.s32.totalorder %s12, 0
      %p67 = por %p65, %p66
      %p68 = scmp.ne.s32.totalorder %s60, %s62
      %p69 = scmp.eq.s32.totalorder %s17, 1
      %p70 = por %p68, %p69
      %p71 = scmp.ne.s32.totalorder %s62, %s63
      %p72 = scmp.eq.s32.totalorder %s17, 0
      %p73 = por %p71, %p72
      %p74 = scmp.ne.s32.totalorder %s62, %s63
      %p75 = scmp.eq.s32.totalorder %s18, 1
      %p76 = por %p74, %p75
      %p78 = scmp.ne.s32.totalorder %s63, %s77
      %p79 = scmp.eq.s32.totalorder %s18, 0
      %p80 = por %p78, %p79
      %s82 = sadd.s32 %s81, 1
      %p85 = scmp.eq.s32.totalorder %s12, 1
      %p86 = scmp.ne.s32.totalorder %s81, %s83
      %p87 = scmp.eq.s32.totalorder %s12, 0
      %p88 = por %p86, %p87
      %p89 = scmp.ne.s32.totalorder %s81, %s83
      %p90 = scmp.eq.s32.totalorder %s17, 1
      %p91 = por %p89, %p90
      %p92 = scmp.ne.s32.totalorder %s83, %s84
      %p93 = scmp.eq.s32.totalorder %s17, 0
      %p94 = por %p92, %p93
      %p95 = scmp.ne.s32.totalorder %s83, %s84
      %p96 = scmp.eq.s32.totalorder %s18, 1
      %p97 = por %p95, %p96
      %p99 = scmp.ne.s32.totalorder %s84, %s98
      %p100 = scmp.eq.s32.totalorder %s18, 0
      %p101 = por %p99, %p100
      %s102 = ssub.s32 %s19, %s31
      %s103 = ssub.s32 %s20, %s27
      %s104 = sor.u32 %s102, %s103
      %p105 = scmp.eq.s32.totalorder %s104, 0
      %s107 = sadd.s32 %s106, 1
      %s108 = scalar_select %p105, %s106, %s107
      %p111 = pneg %p105
      %p112 = scmp.eq.s32.totalorder %s12, 1
      %p113 = por %p111, %p112
      %p114 = scmp.ne.s32.totalorder %s106, %s109
      %p115 = scmp.eq.s32.totalorder %s12, 0
      %p116 = por %p114, %p115
      %p117 = scmp.ne.s32.totalorder %s106, %s109
      %p118 = scmp.eq.s32.totalorder %s17, 1
      %p119 = por %p117, %p118
      %p120 = scmp.ne.s32.totalorder %s109, %s110
      %p121 = scmp.eq.s32.totalorder %s17, 0
      %p122 = por %p120, %p121
      %p123 = scmp.ne.s32.totalorder %s109, %s110
      %p124 = scmp.eq.s32.totalorder %s18, 1
      %p125 = por %p123, %p124
      %p127 = scmp.ne.s32.totalorder %s110, %s126
      %p128 = scmp.eq.s32.totalorder %s18, 0
      %p129 = por %p127, %p128
      %p130 = scmp.le.s32.totalorder 1, %s12
      %p131 = scmp.lt.s32.totalorder %s12, 3
      %p132 = pnand %p130, %p131
      %p133 = pneg %p132
      // Predicated region
      $region9: #{tpu_custom_call.1} parent=5 // pred_check
        _
      $region10: #{tpu_custom_call.1} parent=5 // pred_check_branch
        %135 = sbr.rel (%p132) target = $region12
      $region11: #{tpu_custom_call.1} parent=5 // pred_region
        %s136 = ssub.s32 %s12, 1
        // Predicated region
        $region13: #{tpu_custom_call.1} parent=11 // pred_check
          %p137 = pneg %p73
        $region14: #{tpu_custom_call.1} parent=11 // pred_check_branch
          %139 = sbr.rel (%p137) target = $region16
        $region15: #{tpu_custom_call.1} parent=11 // pred_region
          _
        $region16: #{tpu_custom_call.1} parent=11 // pred_fallthru
          _
        // Predicated region
        $region17: #{tpu_custom_call.1} parent=11 // pred_check
          %p140 = pneg %p94
        $region18: #{tpu_custom_call.1} parent=11 // pred_check_branch
          %142 = sbr.rel (%p140) target = $region20
        $region19: #{tpu_custom_call.1} parent=11 // pred_region
          _
        $region20: #{tpu_custom_call.1} parent=11 // pred_fallthru
          _
      $region12: #{tpu_custom_call.1} parent=5 // pred_fallthru
        _
      %p143 = scmp.lt.s32.totalorder %s12, 2
      // Predicated region
      $region21: #{tpu_custom_call.1} parent=5 // pred_check
        %p144 = pneg %p143
      $region22: #{tpu_custom_call.1} parent=5 // pred_check_branch
        %146 = sbr.rel (%p144) target = $region24
      $region23: #{tpu_custom_call.1} parent=5 // pred_region
        // Predicated region
        $region25: #{tpu_custom_call.1} parent=23 // pred_check
          %p147 = pneg %p46
        $region26: #{tpu_custom_call.1} parent=23 // pred_check_branch
          %149 = sbr.rel (%p147) target = $region28
        $region27: #{tpu_custom_call.1} parent=23 // pred_region
          %p150 = scmp.lt.s32.totalorder %s19, 1
          %s151 = scalar_select %p150, %s19, 1
          %p152 = scmp.lt.s32.totalorder %s20, 0
          %s153 = scalar_select %p152, %s20, 0
          %s154 = smul.addr %s153, 20
          %s155 = smul.addr %s151, 20
          %s156 = sadd.s32 %s154, %s155
          %s157 = smul.addr %s156, 8
          %s158 = scalar_lea.vmem %s0, %s157
        $region28: #{tpu_custom_call.1} parent=23 // pred_fallthru
          _
      $region24: #{tpu_custom_call.1} parent=5 // pred_fallthru
        _
      %p159 = scmp.le.s32.totalorder 1, %s12
      %p160 = scmp.lt.s32.totalorder %s12, 3
      %p161 = pnand %p159, %p160
      %p162 = pneg %p161
      // Predicated region
      $region29: #{tpu_custom_call.1} parent=5 // pred_check
        _
      $region30: #{tpu_custom_call.1} parent=5 // pred_check_branch
        %164 = sbr.rel (%p161) target = $region32
      $region31: #{tpu_custom_call.1} parent=5 // pred_region
        %s165 = ssub.s32 %s12, 1
        %p166 = scmp.lt.s32.totalorder %s21, 1
        %s167 = scalar_select %p166, %s21, 1
        %p168 = scmp.lt.s32.totalorder %s22, 0
        %s169 = scalar_select %p168, %s22, 0
        %s170 = smul.addr %s169, 20
        %s171 = smul.addr %s167, 20
        %s172 = sadd.s32 %s170, %s171
        %s173 = smul.addr %s172, 8
        %s174 = scalar_lea.vmem %s0, %s173
        %p175 = pneg %p52
        %p176 = pneg %p49
        %p177 = pneg %p73
        %p178 = pneg %p70
        %p179 = pneg %p94
        %p180 = pneg %p91
        %p181 = pneg %p122
        %p182 = pneg %p119
        %s183 = sand.u32 %s109, 1
        %s184 = scalar_lea.sflag [#allocation3], %s183
        %s185 = sand.u32 %s109, 1
        %s186 = smul.addr %s185, 128
        %s187 = scalar_lea.vmem [#allocation2], %s186
        %p188 = scmp.lt.s32.totalorder %s21, 1
        %s189 = scalar_select %p188, %s21, 1
        %p190 = scmp.lt.s32.totalorder %s22, 0
        %s191 = scalar_select %p190, %s22, 0
        %s192 = smul.addr %s191, 20
        %s193 = smul.addr %s189, 20
        %s194 = sadd.s32 %s192, %s193
        %s195 = smul.addr %s194, 8
        %s196 = scalar_lea.vmem %s0, %s195
        %v197 = vld [vmem:[%s196] sm:$0xff]
        %v198 = vld [vmem:[%s196 + $0x8] sm:$0xff]
        %v199 = vld [vmem:[%s196 + $0x10] sm:$0xff]
        %v200 = vld [vmem:[%s196 + $0x18] sm:$0xff]
        %v201 = vld [vmem:[%s196 + $0x20] sm:$0xff]
        %v202 = vld [vmem:[%s196 + $0x28] sm:$0xff]
        %v203 = vld [vmem:[%s196 + $0x30] sm:$0xff]
        %v204 = vld [vmem:[%s196 + $0x38] sm:$0xff]
        %v205 = vld [vmem:[%s196 + $0x40] sm:$0xff]
        %v206 = vld [vmem:[%s196 + $0x48] sm:$0xff]
        %v207 = vld [vmem:[%s196 + $0x50] sm:$0xff]
        %v208 = vld [vmem:[%s196 + $0x58] sm:$0xff]
        %v209 = vld [vmem:[%s196 + $0x60] sm:$0xff]
        %v210 = vld [vmem:[%s196 + $0x68] sm:$0xff]
        %v211 = vld [vmem:[%s196 + $0x70] sm:$0xff]
        %v212 = vld [vmem:[%s196 + $0x78] sm:$0xff]
        %v213 = vld [vmem:[%s196 + $0x1] sm:$0xff]
        %v214 = vld [vmem:[%s196 + $0x9] sm:$0xff]
        %v215 = vld [vmem:[%s196 + $0x11] sm:$0xff]
        %v216 = vld [vmem:[%s196 + $0x19] sm:$0xff]
        %v217 = vld [vmem:[%s196 + $0x21] sm:$0xff]
        %v218 = vld [vmem:[%s196 + $0x29] sm:$0xff]
        %v219 = vld [vmem:[%s196 + $0x31] sm:$0xff]
        %v220 = vld [vmem:[%s196 + $0x39] sm:$0xff]
        %v221 = vld [vmem:[%s196 + $0x41] sm:$0xff]
        %v222 = vld [vmem:[%s196 + $0x49] sm:$0xff]
        %v223 = vld [vmem:[%s196 + $0x51] sm:$0xff]
        %v224 = vld [vmem:[%s196 + $0x59] sm:$0xff]
        %v225 = vld [vmem:[%s196 + $0x61] sm:$0xff]
        %v226 = vld [vmem:[%s196 + $0x69] sm:$0xff]
        %v227 = vld [vmem:[%s196 + $0x71] sm:$0xff]
        %v228 = vld [vmem:[%s196 + $0x79] sm:$0xff]
        %v229 = vld [vmem:[%s196 + $0x80] sm:$0xff]
        %v230 = vld [vmem:[%s196 + $0x88] sm:$0xff]
        %v231 = vld [vmem:[%s196 + $0x81] sm:$0xff]
        %v232 = vld [vmem:[%s196 + $0x89] sm:$0xff]
        %v233 = vld [vmem:[%s1] sm:$0xff]
        %v234 = vld [vmem:[%s1 + $0x8] sm:$0xff]
        %s235 = scalar_lea.vmem %s1, 16
        %v236 = vld [vmem:[%s235] sm:$0xff]
        %v237 = vld [vmem:[%s235 + $0x8] sm:$0xff]
        %vm238 = vcmask 130048
        %v240 = vsel %vm238, %v213, 0
        %v243 = vsel %vm238, %v214, 0
        %v246 = vsel %vm238, %v215, 0
        %v249 = vsel %vm238, %v216, 0
        %v252 = vsel %vm238, %v217, 0
        %v255 = vsel %vm238, %v218, 0
        %v258 = vsel %vm238, %v219, 0
        %v261 = vsel %vm238, %v220, 0
        %v264 = vsel %vm238, %v221, 0
        %v267 = vsel %vm238, %v222, 0
        %v270 = vsel %vm238, %v223, 0
        %v273 = vsel %vm238, %v224, 0
        %v276 = vsel %vm238, %v225, 0
        %v279 = vsel %vm238, %v226, 0
        %v282 = vsel %vm238, %v227, 0
        %v285 = vsel %vm238, %v228, 0
        %287 = vmatprep.subr.mxu0 0.0
        %288 = vmatpush1.msra.mxu0 %v236
        %289 = vmatprep.subr.mxu0 0.0
        %290 = vmatpush1.msra.mxu0 %v237
        %291 = vmatprep.subr.mxu0 0.0
        %292 = vmatpush1.msra.mxu0 0.0
        %293 = vmatprep.subr.mxu0 0.0
        %294 = vmatpush1.msra.mxu0 0.0
        %295 = vmatprep.subr.mxu0 0.0
        %296 = vmatpush1.msra.mxu0 0.0
        %297 = vmatprep.subr.mxu0 0.0
        %298 = vmatpush1.msra.mxu0 0.0
        %299 = vmatprep.subr.mxu0 0.0
        %300 = vmatpush1.msra.mxu0 0.0
        %301 = vmatprep.subr.mxu0 0.0
        %302 = vmatpush1.msra.mxu0 0.0
        %303 = vmatprep.subr.mxu0 0.0
        %304 = vmatpush1.msra.mxu0 0.0
        %305 = vmatprep.subr.mxu0 0.0
        %306 = vmatpush1.msra.mxu0 0.0
        %307 = vmatprep.subr.mxu0 0.0
        %308 = vmatpush1.msra.mxu0 0.0
        %309 = vmatprep.subr.mxu0 0.0
        %310 = vmatpush1.msra.mxu0 0.0
        %311 = vmatprep.subr.mxu0 0.0
        %312 = vmatpush1.msra.mxu0 0.0
        %313 = vmatprep.subr.mxu0 0.0
        %314 = vmatpush1.msra.mxu0 0.0
        %315 = vmatprep.subr.mxu0 0.0
        %316 = vmatpush1.msra.mxu0 0.0
        %317 = vmatprep.subr.mxu0 0.0
        %318 = vmatpush1.msra.mxu0 0.0
        %319 = vmatprep.subr.mxu0 0.0
        %320 = vmatpush1.msra.mxu0 0.0
        %321 = vmatprep.subr.mxu0 0.0
        %322 = vmatpush1.msra.mxu0 0.0
        %323 = vmatprep.subr.mxu0 0.0
        %324 = vmatpush1.msra.mxu0 0.0
        %325 = vmatprep.subr.mxu0 0.0
        %326 = vmatpush1.msra.mxu0 0.0
        %327 = vmatprep.subr.mxu0 0.0
        %328 = vmatpush1.msra.mxu0 0.0
        %329 = vmatprep.subr.mxu0 0.0
        %330 = vmatpush1.msra.mxu0 0.0
        %331 = vmatprep.subr.mxu0 0.0
        %332 = vmatpush1.msra.mxu0 0.0
        %333 = vmatprep.subr.mxu0 0.0
        %334 = vmatpush1.msra.mxu0 0.0
        %335 = vmatprep.subr.mxu0 0.0
        %336 = vmatpush1.msra.mxu0 0.0
        %337 = vmatprep.subr.mxu0 0.0
        %338 = vmatpush1.msra.mxu0 0.0
        %339 = vmatprep.subr.mxu0 0.0
        %340 = vmatpush1.msra.mxu0 0.0
        %341 = vmatprep.subr.mxu0 0.0
        %342 = vmatpush1.msra.mxu0 0.0
        %343 = vmatprep.subr.mxu0 0.0
        %344 = vmatpush1.msra.mxu0 0.0
        %345 = vmatprep.subr.mxu0 0.0
        %346 = vmatpush1.msra.mxu0 0.0
        %347 = vmatprep.subr.mxu0 0.0
        %348 = vmatpush1.msra.mxu0 0.0
        %349 = vmatprep.subr.mxu0 0.0
        %350 = vmatpush1.msra.mxu0 0.0
        %351 = vmatprep.mubr.f32.mxu0 0.0
        %352 = vmatmul.mubr.f32.gmra.mrb[0].mxu0 %v240
        %v353 = vpop.f32.mrb[0].mxu0
        %v354 = vadd.f32 0.0, %v353
        %v355 = vpop.f32.mrb[0].mxu0
        %356 = vmatprep.mubr.f32.mxu0 0.0
        %357 = vmatmul.mubr.f32.gmra.mrb[0].mxu0 %v243
        %v358 = vpop.f32.mrb[0].mxu0
        %v359 = vadd.f32 0.0, %v358
        %v360 = vpop.f32.mrb[0].mxu0
        %361 = vmatprep.mubr.f32.mxu0 0.0
        %362 = vmatmul.mubr.f32.gmra.mrb[0].mxu0 %v246
        %v363 = vpop.f32.mrb[0].mxu0
        %v364 = vadd.f32 0.0, %v363
        %v365 = vpop.f32.mrb[0].mxu0
        %366 = vmatprep.mubr.f32.mxu0 0.0
        %367 = vmatmul.mubr.f32.gmra.mrb[0].mxu0 %v249
        %v368 = vpop.f32.mrb[0].mxu0
        %v369 = vadd.f32 0.0, %v368
        %v370 = vpop.f32.mrb[0].mxu0
        %371 = vmatprep.mubr.f32.mxu0 0.0
        %372 = vmatmul.mubr.f32.gmra.mrb[0].mxu0 %v252
        %v373 = vpop.f32.mrb[0].mxu0
        %v374 = vadd.f32 0.0, %v373
        %v375 = vpop.f32.mrb[0].mxu0
        %376 = vmatprep.mubr.f32.mxu0 0.0
        %377 = vmatmul.mubr.f32.gmra.mrb[0].mxu0 %v255
        %v378 = vpop.f32.mrb[0].mxu0
        %v379 = vadd.f32 0.0, %v378
        %v380 = vpop.f32.mrb[0].mxu0
        %381 = vmatprep.mubr.f32.mxu0 0.0
        %382 = vmatmul.mubr.f32.gmra.mrb[0].mxu0 %v258
        %v383 = vpop.f32.mrb[0].mxu0
        %v384 = vadd.f32 0.0, %v383
        %v385 = vpop.f32.mrb[0].mxu0
        %386 = vmatprep.mubr.f32.mxu0 0.0
        %387 = vmatmul.mubr.f32.gmra.mrb[0].mxu0 %v261
        %v388 = vpop.f32.mrb[0].mxu0
        %v389 = vadd.f32 0.0, %v388
        %v390 = vpop.f32.mrb[0].mxu0
        %391 = vmatprep.mubr.f32.mxu0 0.0
        %392 = vmatmul.mubr.f32.gmra.mrb[0].mxu0 %v264
        %v393 = vpop.f32.mrb[0].mxu0
        %v394 = vadd.f32 0.0, %v393
        %v395 = vpop.f32.mrb[0].mxu0
        %396 = vmatprep.mubr.f32.mxu0 0.0
        %397 = vmatmul.mubr.f32.gmra.mrb[0].mxu0 %v267
        %v398 = vpop.f32.mrb[0].mxu0
        %v399 = vadd.f32 0.0, %v398
        %v400 = vpop.f32.mrb[0].mxu0
        %401 = vmatprep.mubr.f32.mxu0 0.0
        %402 = vmatmul.mubr.f32.gmra.mrb[0].mxu0 %v270
        %v403 = vpop.f32.mrb[0].mxu0
        %v404 = vadd.f32 0.0, %v403
        %v405 = vpop.f32.mrb[0].mxu0
        %406 = vmatprep.mubr.f32.mxu0 0.0
        %407 = vmatmul.mubr.f32.gmra.mrb[0].mxu0 %v273
        %v408 = vpop.f32.mrb[0].mxu0
        %v409 = vadd.f32 0.0, %v408
        %v410 = vpop.f32.mrb[0].mxu0
        %411 = vmatprep.mubr.f32.mxu0 0.0
        %412 = vmatmul.mubr.f32.gmra.mrb[0].mxu0 %v276
        %v413 = vpop.f32.mrb[0].mxu0
        %v414 = vadd.f32 0.0, %v413
        %v415 = vpop.f32.mrb[0].mxu0
        %416 = vmatprep.mubr.f32.mxu0 0.0
        %417 = vmatmul.mubr.f32.gmra.mrb[0].mxu0 %v279
        %v418 = vpop.f32.mrb[0].mxu0
        %v419 = vadd.f32 0.0, %v418
        %v420 = vpop.f32.mrb[0].mxu0
        %421 = vmatprep.mubr.f32.mxu0 0.0
        %422 = vmatmul.mubr.f32.gmra.mrb[0].mxu0 %v282
        %v423 = vpop.f32.mrb[0].mxu0
        %v424 = vadd.f32 0.0, %v423
        %v425 = vpop.f32.mrb[0].mxu0
        %426 = vmatprep.mubr.f32.mxu0 0.0
        %427 = vmatmul.mubr.f32.gmra.mrb[0].mxu0 %v285
        %v428 = vpop.f32.mrb[0].mxu0
        %v429 = vadd.f32 0.0, %v428
        %v430 = vpop.f32.mrb[0].mxu0
        %431 = vdwg.mxu0
        %v433 = vsel %vm238, %v197, 0
        %v436 = vsel %vm238, %v198, 0
        %v439 = vsel %vm238, %v199, 0
        %v442 = vsel %vm238, %v200, 0
        %v445 = vsel %vm238, %v201, 0
        %v448 = vsel %vm238, %v202, 0
        %v451 = vsel %vm238, %v203, 0
        %v454 = vsel %vm238, %v204, 0
        %v457 = vsel %vm238, %v205, 0
        %v460 = vsel %vm238, %v206, 0
        %v463 = vsel %vm238, %v207, 0
        %v466 = vsel %vm238, %v208, 0
        %v469 = vsel %vm238, %v209, 0
        %v472 = vsel %vm238, %v210, 0
        %v475 = vsel %vm238, %v211, 0
        %v478 = vsel %vm238, %v212, 0
        %480 = vmatprep.subr.mxu0 0.0
        %481 = vmatpush1.msra.mxu0 %v233
        %482 = vmatprep.subr.mxu0 0.0
        %483 = vmatpush1.msra.mxu0 %v234
        %484 = vmatprep.subr.mxu0 0.0
        %485 = vmatpush1.msra.mxu0 0.0
        %486 = vmatprep.subr.mxu0 0.0
        %487 = vmatpush1.msra.mxu0 0.0
        %488 = vmatprep.subr.mxu0 0.0
        %489 = vmatpush1.msra.mxu0 0.0
        %490 = vmatprep.subr.mxu0 0.0
        %491 = vmatpush1.msra.mxu0 0.0
        %492 = vmatprep.subr.mxu0 0.0
        %493 = vmatpush1.msra.mxu0 0.0
        %494 = vmatprep.subr.mxu0 0.0
        %495 = vmatpush1.msra.mxu0 0.0
        %496 = vmatprep.subr.mxu0 0.0
        %497 = vmatpush1.msra.mxu0 0.0
        %498 = vmatprep.subr.mxu0 0.0
        %499 = vmatpush1.msra.mxu0 0.0
        %500 = vmatprep.subr.mxu0 0.0
        %501 = vmatpush1.msra.mxu0 0.0
        %502 = vmatprep.subr.mxu0 0.0
        %503 = vmatpush1.msra.mxu0 0.0
        %504 = vmatprep.subr.mxu0 0.0
        %505 = vmatpush1.msra.mxu0 0.0
        %506 = vmatprep.subr.mxu0 0.0
        %507 = vmatpush1.msra.mxu0 0.0
        %508 = vmatprep.subr.mxu0 0.0
        %509 = vmatpush1.msra.mxu0 0.0
        %510 = vmatprep.subr.mxu0 0.0
        %511 = vmatpush1.msra.mxu0 0.0
        %512 = vmatprep.subr.mxu0 0.0
        %513 = vmatpush1.msra.mxu0 0.0
        %514 = vmatprep.subr.mxu0 0.0
        %515 = vmatpush1.msra.mxu0 0.0
        %516 = vmatprep.subr.mxu0 0.0
        %517 = vmatpush1.msra.mxu0 0.0
        %518 = vmatprep.subr.mxu0 0.0
        %519 = vmatpush1.msra.mxu0 0.0
        %520 = vmatprep.subr.mxu0 0.0
        %521 = vmatpush1.msra.mxu0 0.0
        %522 = vmatprep.subr.mxu0 0.0
        %523 = vmatpush1.msra.mxu0 0.0
        %524 = vmatprep.subr.mxu0 0.0
        %525 = vmatpush1.msra.mxu0 0.0
        %526 = vmatprep.subr.mxu0 0.0
        %527 = vmatpush1.msra.mxu0 0.0
        %528 = vmatprep.subr.mxu0 0.0
        %529 = vmatpush1.msra.mxu0 0.0
        %530 = vmatprep.subr.mxu0 0.0
        %531 = vmatpush1.msra.mxu0 0.0
        %532 = vmatprep.subr.mxu0 0.0
        %533 = vmatpush1.msra.mxu0 0.0
        %534 = vmatprep.subr.mxu0 0.0
        %535 = vmatpush1.msra.mxu0 0.0
        %536 = vmatprep.subr.mxu0 0.0
        %537 = vmatpush1.msra.mxu0 0.0
        %538 = vmatprep.subr.mxu0 0.0
        %539 = vmatpush1.msra.mxu0 0.0
        %540 = vmatprep.subr.mxu0 0.0
        %541 = vmatpush1.msra.mxu0 0.0
        %542 = vmatprep.subr.mxu0 0.0
        %543 = vmatpush1.msra.mxu0 0.0
        %544 = vmatprep.mubr.f32.mxu0 0.0
        %545 = vmatmul.mubr.f32.gmra.mrb[0].mxu0 %v433
        %v546 = vpop.f32.mrb[0].mxu0
        %v547 = vadd.f32 %v354, %v546
        %v548 = vpop.f32.mrb[0].mxu0
        %549 = vmatprep.mubr.f32.mxu0 0.0
        %550 = vmatmul.mubr.f32.gmra.mrb[0].mxu0 %v436
        %v551 = vpop.f32.mrb[0].mxu0
        %v552 = vadd.f32 %v359, %v551
        %v553 = vpop.f32.mrb[0].mxu0
        %554 = vmatprep.mubr.f32.mxu0 0.0
        %555 = vmatmul.mubr.f32.gmra.mrb[0].mxu0 %v439
        %v556 = vpop.f32.mrb[0].mxu0
        %v557 = vadd.f32 %v364, %v556
        %v558 = vpop.f32.mrb[0].mxu0
        %559 = vmatprep.mubr.f32.mxu0 0.0
        %560 = vmatmul.mubr.f32.gmra.mrb[0].mxu0 %v442
        %v561 = vpop.f32.mrb[0].mxu0
        %v562 = vadd.f32 %v369, %v561
        %v563 = vpop.f32.mrb[0].mxu0
        %564 = vmatprep.mubr.f32.mxu0 0.0
        %565 = vmatmul.mubr.f32.gmra.mrb[0].mxu0 %v445
        %v566 = vpop.f32.mrb[0].mxu0
        %v567 = vadd.f32 %v374, %v566
        %v568 = vpop.f32.mrb[0].mxu0
        %569 = vmatprep.mubr.f32.mxu0 0.0
        %570 = vmatmul.mubr.f32.gmra.mrb[0].mxu0 %v448
        %v571 = vpop.f32.mrb[0].mxu0
        %v572 = vadd.f32 %v379, %v571
        %v573 = vpop.f32.mrb[0].mxu0
        %574 = vmatprep.mubr.f32.mxu0 0.0
        %575 = vmatmul.mubr.f32.gmra.mrb[0].mxu0 %v451
        %v576 = vpop.f32.mrb[0].mxu0
        %v577 = vadd.f32 %v384, %v576
        %v578 = vpop.f32.mrb[0].mxu0
        %579 = vmatprep.mubr.f32.mxu0 0.0
        %580 = vmatmul.mubr.f32.gmra.mrb[0].mxu0 %v454
        %v581 = vpop.f32.mrb[0].mxu0
        %v582 = vadd.f32 %v389, %v581
        %v583 = vpop.f32.mrb[0].mxu0
        %584 = vmatprep.mubr.f32.mxu0 0.0
        %585 = vmatmul.mubr.f32.gmra.mrb[0].mxu0 %v457
        %v586 = vpop.f32.mrb[0].mxu0
        %v587 = vadd.f32 %v394, %v586
        %v588 = vpop.f32.mrb[0].mxu0
        %589 = vmatprep.mubr.f32.mxu0 0.0
        %590 = vmatmul.mubr.f32.gmra.mrb[0].mxu0 %v460
        %v591 = vpop.f32.mrb[0].mxu0
        %v592 = vadd.f32 %v399, %v591
        %v593 = vpop.f32.mrb[0].mxu0
        %594 = vmatprep.mubr.f32.mxu0 0.0
        %595 = vmatmul.mubr.f32.gmra.mrb[0].mxu0 %v463
        %v596 = vpop.f32.mrb[0].mxu0
        %v597 = vadd.f32 %v404, %v596
        %v598 = vpop.f32.mrb[0].mxu0
        %599 = vmatprep.mubr.f32.mxu0 0.0
        %600 = vmatmul.mubr.f32.gmra.mrb[0].mxu0 %v466
        %v601 = vpop.f32.mrb[0].mxu0
        %v602 = vadd.f32 %v409, %v601
        %v603 = vpop.f32.mrb[0].mxu0
        %604 = vmatprep.mubr.f32.mxu0 0.0
        %605 = vmatmul.mubr.f32.gmra.mrb[0].mxu0 %v469
        %v606 = vpop.f32.mrb[0].mxu0
        %v607 = vadd.f32 %v414, %v606
        %v608 = vpop.f32.mrb[0].mxu0
        %609 = vmatprep.mubr.f32.mxu0 0.0
        %610 = vmatmul.mubr.f32.gmra.mrb[0].mxu0 %v472
        %v611 = vpop.f32.mrb[0].mxu0
        %v612 = vadd.f32 %v419, %v611
        %v613 = vpop.f32.mrb[0].mxu0
        %614 = vmatprep.mubr.f32.mxu0 0.0
        %615 = vmatmul.mubr.f32.gmra.mrb[0].mxu0 %v475
        %v616 = vpop.f32.mrb[0].mxu0
        %v617 = vadd.f32 %v424, %v616
        %v618 = vpop.f32.mrb[0].mxu0
        %619 = vmatprep.mubr.f32.mxu0 0.0
        %620 = vmatmul.mubr.f32.gmra.mrb[0].mxu0 %v478
        %v621 = vpop.f32.mrb[0].mxu0
        %v622 = vadd.f32 %v429, %v621
        %v623 = vpop.f32.mrb[0].mxu0
        %624 = vdwg.mxu0
        %s625 = scalar_lea.vmem %s1, 32
        %v626 = vld [vmem:[%s625] sm:$0xff]
        %v627 = vld [vmem:[%s625 + $0x8] sm:$0xff]
        %v629 = vsel %vm238, %v229, 0
        %v632 = vsel %vm238, %v230, 0
        %634 = vmatprep.subr.mxu0 0.0
        %635 = vmatpush1.msra.mxu0 %v626
        %636 = vmatprep.subr.mxu0 0.0
        %637 = vmatpush1.msra.mxu0 %v627
        %638 = vmatprep.subr.mxu0 0.0
        %639 = vmatpush1.msra.mxu0 0.0
        %640 = vmatprep.subr.mxu0 0.0
        %641 = vmatpush1.msra.mxu0 0.0
        %642 = vmatprep.subr.mxu0 0.0
        %643 = vmatpush1.msra.mxu0 0.0
        %644 = vmatprep.subr.mxu0 0.0
        %645 = vmatpush1.msra.mxu0 0.0
        %646 = vmatprep.subr.mxu0 0.0
        %647 = vmatpush1.msra.mxu0 0.0
        %648 = vmatprep.subr.mxu0 0.0
        %649 = vmatpush1.msra.mxu0 0.0
        %650 = vmatprep.subr.mxu0 0.0
        %651 = vmatpush1.msra.mxu0 0.0
        %652 = vmatprep.subr.mxu0 0.0
        %653 = vmatpush1.msra.mxu0 0.0
        %654 = vmatprep.subr.mxu0 0.0
        %655 = vmatpush1.msra.mxu0 0.0
        %656 = vmatprep.subr.mxu0 0.0
        %657 = vmatpush1.msra.mxu0 0.0
        %658 = vmatprep.subr.mxu0 0.0
        %659 = vmatpush1.msra.mxu0 0.0
        %660 = vmatprep.subr.mxu0 0.0
        %661 = vmatpush1.msra.mxu0 0.0
        %662 = vmatprep.subr.mxu0 0.0
        %663 = vmatpush1.msra.mxu0 0.0
        %664 = vmatprep.subr.mxu0 0.0
        %665 = vmatpush1.msra.mxu0 0.0
        %666 = vmatprep.subr.mxu0 0.0
        %667 = vmatpush1.msra.mxu0 0.0
        %668 = vmatprep.subr.mxu0 0.0
        %669 = vmatpush1.msra.mxu0 0.0
        %670 = vmatprep.subr.mxu0 0.0
        %671 = vmatpush1.msra.mxu0 0.0
        %672 = vmatprep.subr.mxu0 0.0
        %673 = vmatpush1.msra.mxu0 0.0
        %674 = vmatprep.subr.mxu0 0.0
        %675 = vmatpush1.msra.mxu0 0.0
        %676 = vmatprep.subr.mxu0 0.0
        %677 = vmatpush1.msra.mxu0 0.0
        %678 = vmatprep.subr.mxu0 0.0
        %679 = vmatpush1.msra.mxu0 0.0
        %680 = vmatprep.subr.mxu0 0.0
        %681 = vmatpush1.msra.mxu0 0.0
        %682 = vmatprep.subr.mxu0 0.0
        %683 = vmatpush1.msra.mxu0 0.0
        %684 = vmatprep.subr.mxu0 0.0
        %685 = vmatpush1.msra.mxu0 0.0
        %686 = vmatprep.subr.mxu0 0.0
        %687 = vmatpush1.msra.mxu0 0.0
        %688 = vmatprep.subr.mxu0 0.0
        %689 = vmatpush1.msra.mxu0 0.0
        %690 = vmatprep.subr.mxu0 0.0
        %691 = vmatpush1.msra.mxu0 0.0
        %692 = vmatprep.subr.mxu0 0.0
        %693 = vmatpush1.msra.mxu0 0.0
        %694 = vmatprep.subr.mxu0 0.0
        %695 = vmatpush1.msra.mxu0 0.0
        %696 = vmatprep.subr.mxu0 0.0
        %697 = vmatpush1.msra.mxu0 0.0
        %698 = vmatprep.mubr.f32.mxu0 0.0
        %699 = vmatmul.mubr.f32.gmra.mrb[0].mxu0 %v439
        %v700 = vpop.f32.mrb[0].mxu0
        %v701 = vadd.f32 0.0, %v700
        %v702 = vpop.f32.mrb[0].mxu0
        %703 = vmatprep.mubr.f32.mxu0 0.0
        %704 = vmatmul.mubr.f32.gmra.mrb[0].mxu0 %v442
        %v705 = vpop.f32.mrb[0].mxu0
        %v706 = vadd.f32 0.0, %v705
        %v707 = vpop.f32.mrb[0].mxu0
        %708 = vmatprep.mubr.f32.mxu0 0.0
        %709 = vmatmul.mubr.f32.gmra.mrb[0].mxu0 %v445
        %v710 = vpop.f32.mrb[0].mxu0
        %v711 = vadd.f32 0.0, %v710
        %v712 = vpop.f32.mrb[0].mxu0
        %713 = vmatprep.mubr.f32.mxu0 0.0
        %714 = vmatmul.mubr.f32.gmra.mrb[0].mxu0 %v448
        %v715 = vpop.f32.mrb[0].mxu0
        %v716 = vadd.f32 0.0, %v715
        %v717 = vpop.f32.mrb[0].mxu0
        %718 = vmatprep.mubr.f32.mxu0 0.0
        %719 = vmatmul.mubr.f32.gmra.mrb[0].mxu0 %v451
        %v720 = vpop.f32.mrb[0].mxu0
        %v721 = vadd.f32 0.0, %v720
        %v722 = vpop.f32.mrb[0].mxu0
        %723 = vmatprep.mubr.f32.mxu0 0.0
        %724 = vmatmul.mubr.f32.gmra.mrb[0].mxu0 %v454
        %v725 = vpop.f32.mrb[0].mxu0
        %v726 = vadd.f32 0.0, %v725
        %v727 = vpop.f32.mrb[0].mxu0
        %728 = vmatprep.mubr.f32.mxu0 0.0
        %729 = vmatmul.mubr.f32.gmra.mrb[0].mxu0 %v457
        %v730 = vpop.f32.mrb[0].mxu0
        %v731 = vadd.f32 0.0, %v730
        %v732 = vpop.f32.mrb[0].mxu0
        %733 = vmatprep.mubr.f32.mxu0 0.0
        %734 = vmatmul.mubr.f32.gmra.mrb[0].mxu0 %v460
        %v735 = vpop.f32.mrb[0].mxu0
        %v736 = vadd.f32 0.0, %v735
        %v737 = vpop.f32.mrb[0].mxu0
        %738 = vmatprep.mubr.f32.mxu0 0.0
        %739 = vmatmul.mubr.f32.gmra.mrb[0].mxu0 %v463
        %v740 = vpop.f32.mrb[0].mxu0
        %v741 = vadd.f32 0.0, %v740
        %v742 = vpop.f32.mrb[0].mxu0
        %743 = vmatprep.mubr.f32.mxu0 0.0
        %744 = vmatmul.mubr.f32.gmra.mrb[0].mxu0 %v466
        %v745 = vpop.f32.mrb[0].mxu0
        %v746 = vadd.f32 0.0, %v745
        %v747 = vpop.f32.mrb[0].mxu0
        %748 = vmatprep.mubr.f32.mxu0 0.0
        %749 = vmatmul.mubr.f32.gmra.mrb[0].mxu0 %v469
        %v750 = vpop.f32.mrb[0].mxu0
        %v751 = vadd.f32 0.0, %v750
        %v752 = vpop.f32.mrb[0].mxu0
        %753 = vmatprep.mubr.f32.mxu0 0.0
        %754 = vmatmul.mubr.f32.gmra.mrb[0].mxu0 %v472
        %v755 = vpop.f32.mrb[0].mxu0
        %v756 = vadd.f32 0.0, %v755
        %v757 = vpop.f32.mrb[0].mxu0
        %758 = vmatprep.mubr.f32.mxu0 0.0
        %759 = vmatmul.mubr.f32.gmra.mrb[0].mxu0 %v475
        %v760 = vpop.f32.mrb[0].mxu0
        %v761 = vadd.f32 0.0, %v760
        %v762 = vpop.f32.mrb[0].mxu0
        %763 = vmatprep.mubr.f32.mxu0 0.0
        %764 = vmatmul.mubr.f32.gmra.mrb[0].mxu0 %v478
        %v765 = vpop.f32.mrb[0].mxu0
        %v766 = vadd.f32 0.0, %v765
        %v767 = vpop.f32.mrb[0].mxu0
        %768 = vmatprep.mubr.f32.mxu0 0.0
        %769 = vmatmul.mubr.f32.gmra.mrb[0].mxu0 %v629
        %v770 = vpop.f32.mrb[0].mxu0
        %v771 = vadd.f32 0.0, %v770
        %v772 = vpop.f32.mrb[0].mxu0
        %773 = vmatprep.mubr.f32.mxu0 0.0
        %774 = vmatmul.mubr.f32.gmra.mrb[0].mxu0 %v632
        %v775 = vpop.f32.mrb[0].mxu0
        %v776 = vadd.f32 0.0, %v775
        %v777 = vpop.f32.mrb[0].mxu0
        %778 = vdwg.mxu0
        %v779 = vadd.f32 %v547, %v701
        %v780 = vadd.f32 %v552, %v706
        %v781 = vadd.f32 %v557, %v711
        %v782 = vadd.f32 %v562, %v716
        %v783 = vadd.f32 %v567, %v721
        %v784 = vadd.f32 %v572, %v726
        %v785 = vadd.f32 %v577, %v731
        %v786 = vadd.f32 %v582, %v736
        %v787 = vadd.f32 %v587, %v741
        %v788 = vadd.f32 %v592, %v746
        %v789 = vadd.f32 %v597, %v751
        %v790 = vadd.f32 %v602, %v756
        %v791 = vadd.f32 %v607, %v761
        %v792 = vadd.f32 %v612, %v766
        %v793 = vadd.f32 %v617, %v771
        %v794 = vadd.f32 %v622, %v776
        %s795 = scalar_lea.vmem %s1, 48
        %v796 = vld [vmem:[%s795] sm:$0xff]
        %v797 = vld [vmem:[%s795 + $0x8] sm:$0xff]
        %v799 = vsel %vm238, %v231, 0
        %v802 = vsel %vm238, %v232, 0
        %804 = vmatprep.subr.mxu0 0.0
        %805 = vmatpush1.msra.mxu0 %v796
        %806 = vmatprep.subr.mxu0 0.0
        %807 = vmatpush1.msra.mxu0 %v797
        %808 = vmatprep.subr.mxu0 0.0
        %809 = vmatpush1.msra.mxu0 0.0
        %810 = vmatprep.subr.mxu0 0.0
        %811 = vmatpush1.msra.mxu0 0.0
        %812 = vmatprep.subr.mxu0 0.0
        %813 = vmatpush1.msra.mxu0 0.0
        %814 = vmatprep.subr.mxu0 0.0
        %815 = vmatpush1.msra.mxu0 0.0
        %816 = vmatprep.subr.mxu0 0.0
        %817 = vmatpush1.msra.mxu0 0.0
        %818 = vmatprep.subr.mxu0 0.0
        %819 = vmatpush1.msra.mxu0 0.0
        %820 = vmatprep.subr.mxu0 0.0
        %821 = vmatpush1.msra.mxu0 0.0
        %822 = vmatprep.subr.mxu0 0.0
        %823 = vmatpush1.msra.mxu0 0.0
        %824 = vmatprep.subr.mxu0 0.0
        %825 = vmatpush1.msra.mxu0 0.0
        %826 = vmatprep.subr.mxu0 0.0
        %827 = vmatpush1.msra.mxu0 0.0
        %828 = vmatprep.subr.mxu0 0.0
        %829 = vmatpush1.msra.mxu0 0.0
        %830 = vmatprep.subr.mxu0 0.0
        %831 = vmatpush1.msra.mxu0 0.0
        %832 = vmatprep.subr.mxu0 0.0
        %833 = vmatpush1.msra.mxu0 0.0
        %834 = vmatprep.subr.mxu0 0.0
        %835 = vmatpush1.msra.mxu0 0.0
        %836 = vmatprep.subr.mxu0 0.0
        %837 = vmatpush1.msra.mxu0 0.0
        %838 = vmatprep.subr.mxu0 0.0
        %839 = vmatpush1.msra.mxu0 0.0
        %840 = vmatprep.subr.mxu0 0.0
        %841 = vmatpush1.msra.mxu0 0.0
        %842 = vmatprep.subr.mxu0 0.0
        %843 = vmatpush1.msra.mxu0 0.0
        %844 = vmatprep.subr.mxu0 0.0
        %845 = vmatpush1.msra.mxu0 0.0
        %846 = vmatprep.subr.mxu0 0.0
        %847 = vmatpush1.msra.mxu0 0.0
        %848 = vmatprep.subr.mxu0 0.0
        %849 = vmatpush1.msra.mxu0 0.0
        %850 = vmatprep.subr.mxu0 0.0
        %851 = vmatpush1.msra.mxu0 0.0
        %852 = vmatprep.subr.mxu0 0.0
        %853 = vmatpush1.msra.mxu0 0.0
        %854 = vmatprep.subr.mxu0 0.0
        %855 = vmatpush1.msra.mxu0 0.0
        %856 = vmatprep.subr.mxu0 0.0
        %857 = vmatpush1.msra.mxu0 0.0
        %858 = vmatprep.subr.mxu0 0.0
        %859 = vmatpush1.msra.mxu0 0.0
        %860 = vmatprep.subr.mxu0 0.0
        %861 = vmatpush1.msra.mxu0 0.0
        %862 = vmatprep.subr.mxu0 0.0
        %863 = vmatpush1.msra.mxu0 0.0
        %864 = vmatprep.subr.mxu0 0.0
        %865 = vmatpush1.msra.mxu0 0.0
        %866 = vmatprep.subr.mxu0 0.0
        %867 = vmatpush1.msra.mxu0 0.0
        %868 = vmatprep.mubr.f32.mxu0 0.0
        %869 = vmatmul.mubr.f32.gmra.mrb[0].mxu0 %v246
        %v870 = vpop.f32.mrb[0].mxu0
        %v871 = vadd.f32 0.0, %v870
        %v872 = vpop.f32.mrb[0].mxu0
        %873 = vmatprep.mubr.f32.mxu0 0.0
        %874 = vmatmul.mubr.f32.gmra.mrb[0].mxu0 %v249
        %v875 = vpop.f32.mrb[0].mxu0
        %v876 = vadd.f32 0.0, %v875
        %v877 = vpop.f32.mrb[0].mxu0
        %878 = vmatprep.mubr.f32.mxu0 0.0
        %879 = vmatmul.mubr.f32.gmra.mrb[0].mxu0 %v252
        %v880 = vpop.f32.mrb[0].mxu0
        %v881 = vadd.f32 0.0, %v880
        %v882 = vpop.f32.mrb[0].mxu0
        %883 = vmatprep.mubr.f32.mxu0 0.0
        %884 = vmatmul.mubr.f32.gmra.mrb[0].mxu0 %v255
        %v885 = vpop.f32.mrb[0].mxu0
        %v886 = vadd.f32 0.0, %v885
        %v887 = vpop.f32.mrb[0].mxu0
        %888 = vmatprep.mubr.f32.mxu0 0.0
        %889 = vmatmul.mubr.f32.gmra.mrb[0].mxu0 %v258
        %v890 = vpop.f32.mrb[0].mxu0
        %v891 = vadd.f32 0.0, %v890
        %v892 = vpop.f32.mrb[0].mxu0
        %893 = vmatprep.mubr.f32.mxu0 0.0
        %894 = vmatmul.mubr.f32.gmra.mrb[0].mxu0 %v261
        %v895 = vpop.f32.mrb[0].mxu0
        %v896 = vadd.f32 0.0, %v895
        %v897 = vpop.f32.mrb[0].mxu0
        %898 = vmatprep.mubr.f32.mxu0 0.0
        %899 = vmatmul.mubr.f32.gmra.mrb[0].mxu0 %v264
        %v900 = vpop.f32.mrb[0].mxu0
        %v901 = vadd.f32 0.0, %v900
        %v902 = vpop.f32.mrb[0].mxu0
        %903 = vmatprep.mubr.f32.mxu0 0.0
        %904 = vmatmul.mubr.f32.gmra.mrb[0].mxu0 %v267
        %v905 = vpop.f32.mrb[0].mxu0
        %v906 = vadd.f32 0.0, %v905
        %v907 = vpop.f32.mrb[0].mxu0
        %908 = vmatprep.mubr.f32.mxu0 0.0
        %909 = vmatmul.mubr.f32.gmra.mrb[0].mxu0 %v270
        %v910 = vpop.f32.mrb[0].mxu0
        %v911 = vadd.f32 0.0, %v910
        %v912 = vpop.f32.mrb[0].mxu0
        %913 = vmatprep.mubr.f32.mxu0 0.0
        %914 = vmatmul.mubr.f32.gmra.mrb[0].mxu0 %v273
        %v915 = vpop.f32.mrb[0].mxu0
        %v916 = vadd.f32 0.0, %v915
        %v917 = vpop.f32.mrb[0].mxu0
        %918 = vmatprep.mubr.f32.mxu0 0.0
        %919 = vmatmul.mubr.f32.gmra.mrb[0].mxu0 %v276
        %v920 = vpop.f32.mrb[0].mxu0
        %v921 = vadd.f32 0.0, %v920
        %v922 = vpop.f32.mrb[0].mxu0
        %923 = vmatprep.mubr.f32.mxu0 0.0
        %924 = vmatmul.mubr.f32.gmra.mrb[0].mxu0 %v279
        %v925 = vpop.f32.mrb[0].mxu0
        %v926 = vadd.f32 0.0, %v925
        %v927 = vpop.f32.mrb[0].mxu0
        %928 = vmatprep.mubr.f32.mxu0 0.0
        %929 = vmatmul.mubr.f32.gmra.mrb[0].mxu0 %v282
        %v930 = vpop.f32.mrb[0].mxu0
        %v931 = vadd.f32 0.0, %v930
        %v932 = vpop.f32.mrb[0].mxu0
        %933 = vmatprep.mubr.f32.mxu0 0.0
        %934 = vmatmul.mubr.f32.gmra.mrb[0].mxu0 %v285
        %v935 = vpop.f32.mrb[0].mxu0
        %v936 = vadd.f32 0.0, %v935
        %v937 = vpop.f32.mrb[0].mxu0
        %938 = vmatprep.mubr.f32.mxu0 0.0
        %939 = vmatmul.mubr.f32.gmra.mrb[0].mxu0 %v799
        %v940 = vpop.f32.mrb[0].mxu0
        %v941 = vadd.f32 0.0, %v940
        %v942 = vpop.f32.mrb[0].mxu0
        %943 = vmatprep.mubr.f32.mxu0 0.0
        %944 = vmatmul.mubr.f32.gmra.mrb[0].mxu0 %v802
        %v945 = vpop.f32.mrb[0].mxu0
        %v946 = vadd.f32 0.0, %v945
        %v947 = vpop.f32.mrb[0].mxu0
        %948 = vdwg.mxu0
        %v949 = vadd.f32 %v779, %v871
        %v950 = vadd.f32 %v780, %v876
        %v951 = vadd.f32 %v781, %v881
        %v952 = vadd.f32 %v782, %v886
        %v953 = vadd.f32 %v783, %v891
        %v954 = vadd.f32 %v784, %v896
        %v955 = vadd.f32 %v785, %v901
        %v956 = vadd.f32 %v786, %v906
        %v957 = vadd.f32 %v787, %v911
        %v958 = vadd.f32 %v788, %v916
        %v959 = vadd.f32 %v789, %v921
        %v960 = vadd.f32 %v790, %v926
        %v961 = vadd.f32 %v791, %v931
        %v962 = vadd.f32 %v792, %v936
        %v963 = vadd.f32 %v793, %v941
        %v964 = vadd.f32 %v794, %v946
        %v965 = vld [vmem:[%s2] sm:$0x1]
        %v967 = vlaneseq
        %v968 = vshrl.u32 %v967, 7
        %v969 = vsub.s32 0, %v968
        %v970 = vrot.slane %v965, %v969
        %v972 = vadd.f32 %v949, %v970
        %v973 = vadd.f32 %v950, %v970
        %v974 = vadd.f32 %v951, %v970
        %v975 = vadd.f32 %v952, %v970
        %v976 = vadd.f32 %v953, %v970
        %v977 = vadd.f32 %v954, %v970
        %v978 = vadd.f32 %v955, %v970
        %v979 = vadd.f32 %v956, %v970
        %v980 = vadd.f32 %v957, %v970
        %v981 = vadd.f32 %v958, %v970
        %v982 = vadd.f32 %v959, %v970
        %v983 = vadd.f32 %v960, %v970
        %v984 = vadd.f32 %v961, %v970
        %v985 = vadd.f32 %v962, %v970
        %v986 = vadd.f32 %v963, %v970
        %v987 = vadd.f32 %v964, %v970
        %988 = vst [vmem:[%s187] sm:$0xff] %v972
        %989 = vst [vmem:[%s187 + $0x8] sm:$0xff] %v973
        %990 = vst [vmem:[%s187 + $0x10] sm:$0xff] %v974
        %991 = vst [vmem:[%s187 + $0x18] sm:$0xff] %v975
        %992 = vst [vmem:[%s187 + $0x20] sm:$0xff] %v976
        %993 = vst [vmem:[%s187 + $0x28] sm:$0xff] %v977
        %994 = vst [vmem:[%s187 + $0x30] sm:$0xff] %v978
        %995 = vst [vmem:[%s187 + $0x38] sm:$0xff] %v979
        %996 = vst [vmem:[%s187 + $0x40] sm:$0xff] %v980
        %997 = vst [vmem:[%s187 + $0x48] sm:$0xff] %v981
        %998 = vst [vmem:[%s187 + $0x50] sm:$0xff] %v982
        %999 = vst [vmem:[%s187 + $0x58] sm:$0xff] %v983
        %1000 = vst [vmem:[%s187 + $0x60] sm:$0xff] %v984
        %1001 = vst [vmem:[%s187 + $0x68] sm:$0xff] %v985
        %1002 = vst [vmem:[%s187 + $0x70] sm:$0xff] %v986
        %1003 = vst [vmem:[%s187 + $0x78] sm:$0xff] %v987
        %s1004 = sand.u32 %s109, 1
        %s1005 = scalar_lea.sflag [#allocation3], %s1004
        %s1006 = sand.u32 %s109, 1
        %s1007 = smul.addr %s1006, 128
        %s1008 = scalar_lea.vmem [#allocation2], %s1007
        // Predicated region
        $region33: #{tpu_custom_call.1} parent=31 // pred_check
          %p1009 = pneg %p119
        $region34: #{tpu_custom_call.1} parent=31 // pred_check_branch
          %1011 = sbr.rel (%p1009) target = $region36
        $region35: #{tpu_custom_call.1} parent=31 // pred_region
          %s1013 = ssub.s32 2048, 2048
          %1014 = vsyncadd %s1005, %s1013
          %s1015 = smul.addr %s22, 16
          %s1016 = smul.addr %s21, 16
          %s1017 = sadd.s32 %s1015, %s1016
          %s1018 = smul.addr %s1017, 128
          %s1019 = scalar_lea.hbm %s3, %s1018
          %s1020 = sshll.u32 %s1008, 4
          %s1021 = int_to_ptr.vmem [resolvable:$true] %s1020
          %1026 = dma.vmem_to_hbm [thread:$0]  %s1021, 2048, %s1019, %s1005, 128, 128, 8
        $region36: #{tpu_custom_call.1} parent=31 // pred_fallthru
          _
      $region32: #{tpu_custom_call.1} parent=5 // pred_fallthru
        _
      %p1027 = scmp.le.s32.totalorder 2, %s12
      // Predicated region
      $region37: #{tpu_custom_call.1} parent=5 // pred_check
        %p1028 = pneg %p1027
      $region38: #{tpu_custom_call.1} parent=5 // pred_check_branch
        %1030 = sbr.rel (%p1028) target = $region40
      $region39: #{tpu_custom_call.1} parent=5 // pred_region
        %s1031 = ssub.s32 %s12, 2
        // Predicated region
        $region41: #{tpu_custom_call.1} parent=39 // pred_check
          %p1032 = pneg %p125
        $region42: #{tpu_custom_call.1} parent=39 // pred_check_branch
          %1034 = sbr.rel (%p1032) target = $region44
        $region43: #{tpu_custom_call.1} parent=39 // pred_region
          %s1035 = sand.u32 %s110, 1
          %s1036 = scalar_lea.sflag [#allocation3], %s1035
          %s1037 = sand.u32 %s110, 1
          %s1038 = smul.addr %s1037, 128
          %s1039 = scalar_lea.vmem [#allocation2], %s1038
          %1040 = dma.done %s1036, 2048
        $region44: #{tpu_custom_call.1} parent=39 // pred_fallthru
          _
      $region40: #{tpu_custom_call.1} parent=5 // pred_fallthru
        _
    $region6: #{tpu_custom_call.1} parent=1 // loop_footer
      %s16 = sadd.s32 1, %s12
    $region7: #{tpu_custom_call.1} parent=1 // loop_footer_branch
      %11 = sbr.rel target = $region3
    $region8: #{tpu_custom_call.1} parent=1 // loop_exit
      _
    %1041 = vsyncpa [#allocation3], 1
    %s1042 = scalar_lea.sflag [#allocation3], 1
    %1043 = vsyncpa %s1042, 1

</llo_original>
